<compile_context>
chip_gen: v7x
topology: tpu7x:2x2x1
jax: 0.10.0
libtpu: 0.0.40
codegen_flags: <defaults>
</compile_context>

<pallas_src>
import functools

import jax
import jax.numpy as jnp
from jax import lax
from jax.experimental import pallas as pl
from jax.experimental.pallas import tpu as pltpu


def _cdiv(a, b):
    return (a + b - 1) // b


def _round_up(x, m):
    return _cdiv(x, m) * m


def _vmem_capacity_bytes():
    """Physical VMEM per TensorCore; conservative fallback if query fails."""
    try:
        info = pltpu.get_tpu_info()
        cap = getattr(info, "vmem_capacity_bytes", None)
        if cap:
            return int(cap)
    except Exception:
        pass
    return 64 << 20  # v7x floor -- legal on every generation


def _visual_embedder_kernel(x_ref, wf_ref, b1_ref, w2_ref, bc_ref, o_ref, *, dp, rc):
    # x_ref:  (tm, Din_p)     activations (compute dtype)
    # wf_ref: (Din_p, 2*Dp)   fused [W1 | Wsc], zero-padded
    # b1_ref: (1, Dp)         linear1 bias (f32)
    # w2_ref: (Dp, Dp)        linear2 weight
    # bc_ref: (1, Dp)         b2 + bsc pre-added (f32)
    # o_ref:  (tm, Dp)
    wf = wf_ref[...]
    w2 = w2_ref[...]
    b1 = b1_ref[...]
    bc = bc_ref[...]

    def compute_rows(r0):
        x = x_ref[pl.ds(r0, rc), :]
        # One MXU pass over x yields both the linear1 pre-activation and the
        # shortcut projection (column split is lane-aligned: Dp % 128 == 0).
        xf = jnp.dot(x, wf, preferred_element_type=jnp.float32)      # (rc, 2*Dp)
        h = jnp.maximum(xf[:, :dp] + b1, 0.0)                        # relu(linear1)
        sc = xf[:, dp:]                                              # shortcut (bias folded into bc)
        out = jnp.dot(h.astype(w2.dtype), w2, preferred_element_type=jnp.float32)
        o_ref[pl.ds(r0, rc), :] = (out + sc + bc).astype(o_ref.dtype)

    nchunks = x_ref.shape[0] // rc
    if nchunks == 1:
        compute_rows(0)
    else:
        def body(c, carry):
            compute_rows(pl.multiple_of(c * rc, 8))
            return carry
        lax.fori_loop(0, nchunks, body, 0, unroll=True)


def pack_visual_embedder_params(w1, b1, w2, b2, wsc, bsc, *,
                                compute_dtype=jnp.bfloat16):
    """One-time weight preprocessing (padding / casting / fusing), hoisted out
    of the per-call hot path. Weights are [in, out]; biases [out] or [1, out]."""
    din, dout = w1.shape
    dp = _round_up(dout, 128)     # lane-dense output/hidden dim
    din_p = _round_up(din, 128)   # lane-dense contraction dim
    pad_o, pad_i = dp - dout, din_p - din
    f32 = jnp.float32

    w1p = jnp.pad(w1.astype(f32), ((0, pad_i), (0, pad_o)))
    wscp = jnp.pad(wsc.astype(f32), ((0, pad_i), (0, pad_o)))
    w2p = jnp.pad(w2.astype(f32), ((0, pad_o), (0, pad_o)))
    b1p = jnp.pad(b1.reshape(1, -1).astype(f32), ((0, 0), (0, pad_o)))
    bcp = jnp.pad((b2.reshape(1, -1) + bsc.reshape(1, -1)).astype(f32),
                  ((0, 0), (0, pad_o)))

    return {
        "wf": jnp.concatenate([w1p, wscp], axis=1).astype(compute_dtype),  # (Din_p, 2*Dp)
        "w2": w2p.astype(compute_dtype),                                   # (Dp, Dp)
        "b1": b1p,                                                         # (1, Dp) f32
        "bc": bcp,                                                         # (1, Dp) f32
        "din": din, "dout": dout, "din_p": din_p, "dp": dp,
        "compute_dtype": compute_dtype,
    }


def visual_embedder(feat, params, *, tm=512, out_dtype=None):
    """feat: [..., input_dim]; params from pack_visual_embedder_params()."""
    din, dout = params["din"], params["dout"]
    din_p, dp = params["din_p"], params["dp"]
    compute_dtype = params["compute_dtype"]
    if out_dtype is None:
        out_dtype = feat.dtype

    orig_shape = feat.shape
    assert orig_shape[-1] == din, "last dim of feat must equal input_dim"
    x = feat.reshape(-1, din).astype(compute_dtype)
    m = x.shape[0]
    if din_p != din:
        x = jnp.pad(x, ((0, 0), (0, din_p - din)))   # zero cols: value-preserving

    # --- balanced row tiling; >=2 grid steps when m is large enough so the
    #     second TensorCore on v7x gets work under ("parallel",) semantics. ---
    min_tiles = 2 if m > 64 else 1
    ntiles = max(_cdiv(m, tm), min_tiles)
    tm_eff = _round_up(_cdiv(m, ntiles), 8)
    ntiles = _cdiv(m, tm_eff)
    mp = ntiles * tm_eff
    if mp != m:
        x = jnp.pad(x, ((0, mp - m), (0, 0)))        # padded rows discarded below

    # Inner row chunk: largest divisor of tm_eff that is a multiple of 8 and
    # <= 128, keeping the f32 intermediates small and overlapping VPU epilogue
    # with the next chunk's MXU work.
    rc = tm_eff
    for nc in range(1, tm_eff // 8 + 1):
        if tm_eff % nc == 0 and (tm_eff // nc) % 8 == 0 and tm_eff // nc <= 128:
            rc = tm_eff // nc
            break

    itemsize = jnp.dtype(compute_dtype).itemsize
    out_itemsize = jnp.dtype(out_dtype).itemsize

    # --- cost estimate -------------------------------------------------------
    weight_hbm_bytes = (din_p * 2 * dp + dp * dp) * itemsize + 2 * dp * 4
    flops = 2 * mp * (din_p * 2 * dp + dp * dp)
    bytes_accessed = mp * din_p * itemsize + weight_hbm_bytes + mp * dp * out_itemsize
    cost = pl.CostEstimate(flops=flops, transcendentals=0,
                           bytes_accessed=bytes_accessed)

    # --- VMEM budget: 1x weights (Buffered(1)) + 2x x/out tiles (default
    #     double-buffering) + in-kernel f32 intermediates + small headroom,
    #     capped at 85% of the generation's physical VMEM. ---------------------
    weight_vmem = weight_hbm_bytes
    io_vmem = 2 * tm_eff * (din_p * itemsize + dp * out_itemsize)
    interm_vmem = rc * dp * (2 * 4 + itemsize + 4)   # xf (f32, 2*Dp) + h + f32 acc
    budget = weight_vmem + io_vmem + interm_vmem + (4 << 20)
    cap = int(_vmem_capacity_bytes() * 0.85)
    vmem_limit = int(min(max(budget, 32 << 20), cap))

    kernel = functools.partial(_visual_embedder_kernel, dp=dp, rc=rc)
    const = lambda i: (0, 0)  # resident across the whole grid

    def _build(weight_pipeline_mode):
        def wspec(shape):
            if weight_pipeline_mode is None:
                return pl.BlockSpec(shape, const)
            return pl.BlockSpec(shape, const, pipeline_mode=weight_pipeline_mode)

        return pl.pallas_call(
            kernel,
            out_shape=jax.ShapeDtypeStruct((mp, dp), out_dtype),
            grid_spec=pltpu.PrefetchScalarGridSpec(
                num_scalar_prefetch=0,
                grid=(ntiles,),
                in_specs=[
                    pl.BlockSpec((tm_eff, din_p), lambda i: (i, 0)),  # x rows
                    wspec((din_p, 2 * dp)),                           # [W1 | Wsc]
                    wspec((1, dp)),                                   # b1
                    wspec((dp, dp)),                                  # W2
                    wspec((1, dp)),                                   # b2 + bsc
                ],
                out_specs=pl.BlockSpec((tm_eff, dp), lambda i: (i, 0)),
            ),
            compiler_params=pltpu.CompilerParams(
                dimension_semantics=("parallel",),
                vmem_limit_bytes=vmem_limit),
            cost_estimate=cost,
        )

    args = (x, params["wf"], params["b1"], params["w2"], params["bc"])
    try:
        out = _build(pl.Buffered(1))(*args)   # single-buffered resident weights
    except Exception:
        # TODO(synk): remove fallback once Buffered(1) on constant-index blocks
        #             is confirmed across target jax versions.
        out = _build(None)(*args)

    out = out[:m, :dout]
    return out.reshape(*orig_shape[:-1], dout)


def _ref_forward(feat, w1, b1, w2, b2, wsc, bsc):
    h = jnp.maximum(feat @ w1 + b1, 0.0)
    return (h @ w2 + b2) + (feat @ wsc + bsc)


if __name__ == "__main__":
    key = jax.random.PRNGKey(0)
    batch, seq = 2, 8
    input_dim, output_dim = 32, 32

    ks = jax.random.split(key, 7)
    feat = jax.random.normal(ks[0], (batch, seq, input_dim), jnp.float32)

    # Deterministic parameter init (PyTorch-Linear-like uniform bounds),
    # stored pre-transposed as [in, out].
    def init_linear(kw, kb, fan_in, fan_out):
        bound = 1.0 / (fan_in ** 0.5)
        w = jax.random.uniform(kw, (fan_in, fan_out), jnp.float32, -bound, bound)
        b = jax.random.uniform(kb, (1, fan_out), jnp.float32, -bound, bound)
        return w, b

    w1, b1 = init_linear(ks[1], ks[2], input_dim, output_dim)
    w2, b2 = init_linear(ks[3], ks[4], output_dim, output_dim)
    wsc, bsc = init_linear(ks[5], ks[6], input_dim, output_dim)

    ref = _ref_forward(feat, w1, b1, w2, b2, wsc, bsc)

    # Weights are packed ONCE (padding/cast/fuse hoisted out of the hot path).
    # f32 compute path: tight correctness check.
    params_f32 = pack_visual_embedder_params(w1, b1, w2, b2, wsc, bsc,
                                             compute_dtype=jnp.float32)
    out_f32 = jax.block_until_ready(visual_embedder(feat, params_f32))
    assert out_f32.shape == (batch, seq, output_dim)
    assert jnp.allclose(out_f32, ref, atol=1e-4, rtol=1e-4), "f32 mismatch vs reference"

    # bf16 compute path (default): loose tolerance.
    params_bf16 = pack_visual_embedder_params(w1, b1, w2, b2, wsc, bsc)
    out_bf16 = jax.block_until_ready(visual_embedder(feat, params_bf16))
    assert out_bf16.shape == (batch, seq, output_dim)
    assert jnp.allclose(out_bf16.astype(jnp.float32), ref, atol=1e-1, rtol=1e-1), \
        "bf16 mismatch vs reference"

    print("KERNEL_OK")
</pallas_src>

<mosaic_0001>
module attributes {stable_mosaic.version = 11 : i64} {
  func.func @_visual_embedder_kernel(%arg0: i32, %arg1: memref<16x128xf32, #tpu.memory_space<vmem>>, %arg2: memref<128x256xf32, #tpu.memory_space<vmem>>, %arg3: memref<1x128xf32, #tpu.memory_space<vmem>>, %arg4: memref<128x128xf32, #tpu.memory_space<vmem>>, %arg5: memref<1x128xf32, #tpu.memory_space<vmem>>, %arg6: memref<16x128xf32, #tpu.memory_space<vmem>>) attributes {dimension_semantics = [#tpu.dimension_semantics<parallel>], iteration_bounds = array<i64: 1>, scalar_prefetch = 0 : i64, scratch_operands = 0 : i64, tpu.core_type = #tpu.core_type<tc>, window_params = [{transform_indices = @transform_0, window_bounds = array<i64: 16, 128>}, {pipeline_mode = #tpu.pipeline_mode<synchronous>, transform_indices = @transform_1, window_bounds = array<i64: 128, 256>}, {pipeline_mode = #tpu.pipeline_mode<synchronous>, transform_indices = @transform_2, window_bounds = array<i64: 1, 128>}, {pipeline_mode = #tpu.pipeline_mode<synchronous>, transform_indices = @transform_3, window_bounds = array<i64: 128, 128>}, {pipeline_mode = #tpu.pipeline_mode<synchronous>, transform_indices = @transform_4, window_bounds = array<i64: 1, 128>}, {transform_indices = @transform_5, window_bounds = array<i64: 16, 128>}]} {
    %c0 = arith.constant 0 : index
    %c0_0 = arith.constant 0 : index
    %0 = vector.load %arg2[%c0, %c0_0] : memref<128x256xf32, #tpu.memory_space<vmem>>, vector<128x256xf32>
    %c0_1 = arith.constant 0 : index
    %c0_2 = arith.constant 0 : index
    %1 = vector.load %arg4[%c0_1, %c0_2] : memref<128x128xf32, #tpu.memory_space<vmem>>, vector<128x128xf32>
    %c0_3 = arith.constant 0 : index
    %c0_4 = arith.constant 0 : index
    %2 = vector.load %arg3[%c0_3, %c0_4] : memref<1x128xf32, #tpu.memory_space<vmem>>, vector<1x128xf32>
    %c0_5 = arith.constant 0 : index
    %c0_6 = arith.constant 0 : index
    %3 = vector.load %arg5[%c0_5, %c0_6] : memref<1x128xf32, #tpu.memory_space<vmem>>, vector<1x128xf32>
    %c0_7 = arith.constant 0 : index
    %c0_8 = arith.constant 0 : index
    %4 = vector.load %arg1[%c0_7, %c0_8] : memref<16x128xf32, #tpu.memory_space<vmem>>, vector<16x128xf32>
    %cst = arith.constant dense<0.000000e+00> : vector<16x256xf32>
    %5 = tpu.matmul %4, %0, %cst {dimension_numbers = #tpu.dot_dimension_numbers<[1], [0], [0], [1], [0, 0, 1, 1], [], []>} : vector<16x128xf32>, vector<128x256xf32>, vector<16x256xf32> -> vector<16x256xf32>
    %6 = vector.extract_strided_slice %5 {offsets = [0, 0], sizes = [16, 128], strides = [1, 1]} : vector<16x256xf32> to vector<16x128xf32>
    %7 = vector.broadcast %2 : vector<1x128xf32> to vector<16x128xf32>
    %8 = arith.addf %6, %7 : vector<16x128xf32>
    %cst_9 = arith.constant 0.000000e+00 : f32
    %9 = vector.broadcast %cst_9 : f32 to vector<16x128xf32>
    %10 = arith.maximumf %8, %9 : vector<16x128xf32>
    %11 = vector.extract_strided_slice %5 {offsets = [0, 128], sizes = [16, 128], strides = [1, 1]} : vector<16x256xf32> to vector<16x128xf32>
    %cst_10 = arith.constant dense<0.000000e+00> : vector<16x128xf32>
    %12 = tpu.matmul %10, %1, %cst_10 {dimension_numbers = #tpu.dot_dimension_numbers<[1], [0], [0], [1], [0, 0, 1, 1], [], []>} : vector<16x128xf32>, vector<128x128xf32>, vector<16x128xf32> -> vector<16x128xf32>
    %13 = arith.addf %12, %11 : vector<16x128xf32>
    %14 = vector.broadcast %3 : vector<1x128xf32> to vector<16x128xf32>
    %15 = arith.addf %13, %14 : vector<16x128xf32>
    %c0_11 = arith.constant 0 : index
    %c0_12 = arith.constant 0 : index
    %16 = vector.load %arg6[%c0_11, %c0_12] : memref<16x128xf32, #tpu.memory_space<vmem>>, vector<16x128xf32>
    tpu.vector_store %arg6[%c0_11, %c0_12], %15 {strides = array<i32>} : memref<16x128xf32, #tpu.memory_space<vmem>>, vector<16x128xf32>,
    return
  }
  func.func @transform_0(%arg0: i32) -> (i32, i32) {
    %c0_i32 = arith.constant 0 : i32
    %c0_i32_0 = arith.constant 0 : i32
    return %arg0, %c0_i32 : i32, i32
  }
  func.func @transform_1(%arg0: i32) -> (i32, i32) {
    %c0_i32 = arith.constant 0 : i32
    %c0_i32_0 = arith.constant 0 : i32
    %c0_i32_1 = arith.constant 0 : i32
    return %c0_i32, %c0_i32_0 : i32, i32
  }
  func.func @transform_2(%arg0: i32) -> (i32, i32) {
    %c0_i32 = arith.constant 0 : i32
    %c0_i32_0 = arith.constant 0 : i32
    %c0_i32_1 = arith.constant 0 : i32
    return %c0_i32, %c0_i32_0 : i32, i32
  }
  func.func @transform_3(%arg0: i32) -> (i32, i32) {
    %c0_i32 = arith.constant 0 : i32
    %c0_i32_0 = arith.constant 0 : i32
    %c0_i32_1 = arith.constant 0 : i32
    return %c0_i32, %c0_i32_0 : i32, i32
  }
  func.func @transform_4(%arg0: i32) -> (i32, i32) {
    %c0_i32 = arith.constant 0 : i32
    %c0_i32_0 = arith.constant 0 : i32
    %c0_i32_1 = arith.constant 0 : i32
    return %c0_i32, %c0_i32_0 : i32, i32
  }
  func.func @transform_5(%arg0: i32) -> (i32, i32) {
    %c0_i32 = arith.constant 0 : i32
    %c0_i32_0 = arith.constant 0 : i32
    return %arg0, %c0_i32 : i32, i32
  }
}

module attributes {stable_mosaic.version = 11 : i64} {
  func.func @_visual_embedder_kernel(%arg0: i32, %arg1: memref<16x128xf32, #tpu.memory_space<vmem>>, %arg2: memref<128x256xf32, #tpu.memory_space<vmem>>, %arg3: memref<1x128xf32, #tpu.memory_space<vmem>>, %arg4: memref<128x128xf32, #tpu.memory_space<vmem>>, %arg5: memref<1x128xf32, #tpu.memory_space<vmem>>, %arg6: memref<16x128xf32, #tpu.memory_space<vmem>>) attributes {dimension_semantics = [#tpu.dimension_semantics<parallel>], iteration_bounds = array<i64: 1>, scalar_prefetch = 0 : i64, scratch_operands = 0 : i64, tpu.core_type = #tpu.core_type<tc>, window_params = [{transform_indices = @transform_0, window_bounds = array<i64: 16, 128>}, {pipeline_mode = #tpu.pipeline_mode<synchronous>, transform_indices = @transform_1, window_bounds = array<i64: 128, 256>}, {pipeline_mode = #tpu.pipeline_mode<synchronous>, transform_indices = @transform_2, window_bounds = array<i64: 1, 128>}, {pipeline_mode = #tpu.pipeline_mode<synchronous>, transform_indices = @transform_3, window_bounds = array<i64: 128, 128>}, {pipeline_mode = #tpu.pipeline_mode<synchronous>, transform_indices = @transform_4, window_bounds = array<i64: 1, 128>}, {transform_indices = @transform_5, window_bounds = array<i64: 16, 128>}]} {
    %c0 = arith.constant 0 : index
    %c0_0 = arith.constant 0 : index
    %0 = vector.load %arg2[%c0, %c0_0] : memref<128x256xf32, #tpu.memory_space<vmem>>, vector<128x256xf32>
    %c0_1 = arith.constant 0 : index
    %c0_2 = arith.constant 0 : index
    %1 = vector.load %arg4[%c0_1, %c0_2] : memref<128x128xf32, #tpu.memory_space<vmem>>, vector<128x128xf32>
    %c0_3 = arith.constant 0 : index
    %c0_4 = arith.constant 0 : index
    %2 = vector.load %arg3[%c0_3, %c0_4] : memref<1x128xf32, #tpu.memory_space<vmem>>, vector<1x128xf32>
    %c0_5 = arith.constant 0 : index
    %c0_6 = arith.constant 0 : index
    %3 = vector.load %arg5[%c0_5, %c0_6] : memref<1x128xf32, #tpu.memory_space<vmem>>, vector<1x128xf32>
    %c0_7 = arith.constant 0 : index
    %c0_8 = arith.constant 0 : index
    %4 = vector.load %arg1[%c0_7, %c0_8] : memref<16x128xf32, #tpu.memory_space<vmem>>, vector<16x128xf32>
    %cst = arith.constant dense<0.000000e+00> : vector<16x256xf32>
    %5 = tpu.matmul %4, %0, %cst {dimension_numbers = #tpu.dot_dimension_numbers<[1], [0], [0], [1], [0, 0, 1, 1], [], []>} : vector<16x128xf32>, vector<128x256xf32>, vector<16x256xf32> -> vector<16x256xf32>
    %6 = vector.extract_strided_slice %5 {offsets = [0, 0], sizes = [16, 128], strides = [1, 1]} : vector<16x256xf32> to vector<16x128xf32>
    %7 = vector.broadcast %2 : vector<1x128xf32> to vector<16x128xf32>
    %8 = arith.addf %6, %7 : vector<16x128xf32>
    %cst_9 = arith.constant 0.000000e+00 : f32
    %9 = vector.broadcast %cst_9 : f32 to vector<16x128xf32>
    %10 = arith.maximumf %8, %9 : vector<16x128xf32>
    %11 = vector.extract_strided_slice %5 {offsets = [0, 128], sizes = [16, 128], strides = [1, 1]} : vector<16x256xf32> to vector<16x128xf32>
    %cst_10 = arith.constant dense<0.000000e+00> : vector<16x128xf32>
    %12 = tpu.matmul %10, %1, %cst_10 {dimension_numbers = #tpu.dot_dimension_numbers<[1], [0], [0], [1], [0, 0, 1, 1], [], []>} : vector<16x128xf32>, vector<128x128xf32>, vector<16x128xf32> -> vector<16x128xf32>
    %13 = arith.addf %12, %11 : vector<16x128xf32>
    %14 = vector.broadcast %3 : vector<1x128xf32> to vector<16x128xf32>
    %15 = arith.addf %13, %14 : vector<16x128xf32>
    %c0_11 = arith.constant 0 : index
    %c0_12 = arith.constant 0 : index
    %16 = vector.load %arg6[%c0_11, %c0_12] : memref<16x128xf32, #tpu.memory_space<vmem>>, vector<16x128xf32>
    tpu.vector_store %arg6[%c0_11, %c0_12], %15 {strides = array<i32>} : memref<16x128xf32, #tpu.memory_space<vmem>>, vector<16x128xf32>,
    return
  }
  func.func @transform_0(%arg0: i32) -> (i32, i32) {
    %c0_i32 = arith.constant 0 : i32
    %c0_i32_0 = arith.constant 0 : i32
    return %arg0, %c0_i32 : i32, i32
  }
  func.func @transform_1(%arg0: i32) -> (i32, i32) {
    %c0_i32 = arith.constant 0 : i32
    %c0_i32_0 = arith.constant 0 : i32
    %c0_i32_1 = arith.constant 0 : i32
    return %c0_i32, %c0_i32_0 : i32, i32
  }
  func.func @transform_2(%arg0: i32) -> (i32, i32) {
    %c0_i32 = arith.constant 0 : i32
    %c0_i32_0 = arith.constant 0 : i32
    %c0_i32_1 = arith.constant 0 : i32
    return %c0_i32, %c0_i32_0 : i32, i32
  }
  func.func @transform_3(%arg0: i32) -> (i32, i32) {
    %c0_i32 = arith.constant 0 : i32
    %c0_i32_0 = arith.constant 0 : i32
    %c0_i32_1 = arith.constant 0 : i32
    return %c0_i32, %c0_i32_0 : i32, i32
  }
  func.func @transform_4(%arg0: i32) -> (i32, i32) {
    %c0_i32 = arith.constant 0 : i32
    %c0_i32_0 = arith.constant 0 : i32
    %c0_i32_1 = arith.constant 0 : i32
    return %c0_i32, %c0_i32_0 : i32, i32
  }
  func.func @transform_5(%arg0: i32) -> (i32, i32) {
    %c0_i32 = arith.constant 0 : i32
    %c0_i32_0 = arith.constant 0 : i32
    return %arg0, %c0_i32 : i32, i32
  }
}

</mosaic_0001>

<llo_original>
// kernel: tpu_custom_call.1
$region0: #{tpu_custom_call.1}
  #allocation0 [shape = 'u32[]', space=smem, size = 0x4, offset = 0x4, fixed_abs, tag = 'smem constant byte address 0x4 - core index']
  #allocation1 [shape = 'u32[144,128]{1,0:T(1,128)}', space=vmem, size = 0x12000, scoped, tag = 'internal scratch']
  %s0 = inlined_call_operand.hbm [shape: f32[16,128], index: 0, kind: input, shape index: {}]
  %s1 = inlined_call_operand.hbm [shape: f32[128,256], index: 1, kind: input, shape index: {}]
  %s2 = inlined_call_operand.vmem [shape: f32[1,128], index: 2, kind: input, shape index: {}]
  %s3 = inlined_call_operand.hbm [shape: f32[128,128], index: 3, kind: input, shape index: {}]
  %s4 = inlined_call_operand.vmem [shape: f32[1,128], index: 4, kind: input, shape index: {}]
  %s5 = inlined_call_operand.hbm [shape: f32[16,128], index: 5, kind: output, shape index: {}]
  %s6 = sld [smem:[#allocation0]]
  $region42: #{tpu_custom_call.1} parent=0
    _
  %s8 = ssub.s32 1, %s6
  %s9 = scalar_select 0, %s8, %s6
  $region1: #{tpu_custom_call.1} parent=0
    #allocation2 [shape = 'u8[8192]{0}', space=vmem, size = 0x2000, scoped, tag = 'input window, operand 0, single buffered']
    #allocation3 [shape = 's32[1]{0}', space=sflag, size = 0x4, scoped, tag = 'scoped memory for tpu_custom_call.1']
    #allocation4 [shape = 's32[1]{0}', space=sflag, size = 0x4, scoped, tag = 'scoped memory for tpu_custom_call.1']
    #allocation5 [shape = 'u8[131072]{0}', space=vmem, size = 0x20000, scoped, tag = 'input window, operand 1, single buffered']
    #allocation6 [shape = 's32[1]{0}', space=sflag, size = 0x4, scoped, tag = 'scoped memory for tpu_custom_call.1']
    #allocation7 [shape = 'u8[65536]{0}', space=vmem, size = 0x10000, scoped, tag = 'input window, operand 3, single buffered']
    #allocation8 [shape = 'u8[8192]{0}', space=vmem, size = 0x2000, scoped, tag = 'output window, operand 0, single buffered']
    %10 = vsyncpa [#allocation3], 0
    %11 = vsyncpa [#allocation6], 0
    %12 = vsyncpa [#allocation4], 0
    // Predicated region
    $region2: #{tpu_custom_call.1} parent=1 // pred_check
      _
    $region3: #{tpu_custom_call.1} parent=1 // pred_check_branch
      %14 = sbr.rel (0) target = $region5
    $region4: #{tpu_custom_call.1} parent=1 // pred_region
      %s16 = ssub.s32 256, 256
      %17 = vsyncadd [#allocation3], %s16
      %s18 = sshll.u32 [#allocation2], 4
      %s19 = int_to_ptr.vmem [resolvable:$true] %s18
      %24 = dma.hbm_to_vmem [thread:$0]  %s0, 256, %s19, [#allocation3], 128, 128, 8
    $region5: #{tpu_custom_call.1} parent=1 // pred_fallthru
      _
    // Predicated region
    $region6: #{tpu_custom_call.1} parent=1 // pred_check
      _
    $region7: #{tpu_custom_call.1} parent=1 // pred_check_branch
      %26 = sbr.rel (0) target = $region9
    $region8: #{tpu_custom_call.1} parent=1 // pred_region
      %s28 = ssub.s32 4096, 4096
      %29 = vsyncadd [#allocation6], %s28
      %s30 = sshll.u32 [#allocation5], 4
      %s31 = int_to_ptr.vmem [resolvable:$true] %s30
      %36 = dma.hbm_to_vmem [thread:$0]  %s1, 4096, %s31, [#allocation6], 256, 256, 16
    $region9: #{tpu_custom_call.1} parent=1 // pred_fallthru
      _
    // Predicated region
    $region10: #{tpu_custom_call.1} parent=1 // pred_check
      _
    $region11: #{tpu_custom_call.1} parent=1 // pred_check_branch
      %38 = sbr.rel (0) target = $region13
    $region12: #{tpu_custom_call.1} parent=1 // pred_region
      _
    $region13: #{tpu_custom_call.1} parent=1 // pred_fallthru
      _
    // Predicated region
    $region14: #{tpu_custom_call.1} parent=1 // pred_check
      _
    $region15: #{tpu_custom_call.1} parent=1 // pred_check_branch
      %40 = sbr.rel (0) target = $region17
    $region16: #{tpu_custom_call.1} parent=1 // pred_region
      %s42 = ssub.s32 2048, 2048
      %43 = vsyncadd [#allocation6], %s42
      %s44 = sshll.u32 [#allocation7], 4
      %s45 = int_to_ptr.vmem [resolvable:$true] %s44
      %50 = dma.hbm_to_vmem [thread:$0]  %s3, 2048, %s45, [#allocation6], 128, 128, 8
    $region17: #{tpu_custom_call.1} parent=1 // pred_fallthru
      _
    // Predicated region
    $region18: #{tpu_custom_call.1} parent=1 // pred_check
      _
    $region19: #{tpu_custom_call.1} parent=1 // pred_check_branch
      %52 = sbr.rel (0) target = $region21
    $region20: #{tpu_custom_call.1} parent=1 // pred_region
      _
    $region21: #{tpu_custom_call.1} parent=1 // pred_fallthru
      _
    // Predicated region
    $region22: #{tpu_custom_call.1} parent=1 // pred_check
      _
    $region23: #{tpu_custom_call.1} parent=1 // pred_check_branch
      %54 = sbr.rel (0) target = $region25
    $region24: #{tpu_custom_call.1} parent=1 // pred_region
      %55 = dma.done [#allocation3], 256
    $region25: #{tpu_custom_call.1} parent=1 // pred_fallthru
      _
    // Predicated region
    $region26: #{tpu_custom_call.1} parent=1 // pred_check
      _
    $region27: #{tpu_custom_call.1} parent=1 // pred_check_branch
      %57 = sbr.rel (0) target = $region29
    $region28: #{tpu_custom_call.1} parent=1 // pred_region
      %58 = dma.done [#allocation6], 4096
    $region29: #{tpu_custom_call.1} parent=1 // pred_fallthru
      _
    // Predicated region
    $region30: #{tpu_custom_call.1} parent=1 // pred_check
      _
    $region31: #{tpu_custom_call.1} parent=1 // pred_check_branch
      %60 = sbr.rel (0) target = $region33
    $region32: #{tpu_custom_call.1} parent=1 // pred_region
      %61 = dma.done [#allocation6], 2048
    $region33: #{tpu_custom_call.1} parent=1 // pred_fallthru
      _
    %v62 = vld [vmem:[#allocation5] sm:$0xff]
    %v63 = vld [vmem:[#allocation5 + $0x8] sm:$0xff]
    %v64 = vld [vmem:[#allocation5 + $0x10] sm:$0xff]
    %v65 = vld [vmem:[#allocation5 + $0x18] sm:$0xff]
    %v66 = vld [vmem:[#allocation5 + $0x20] sm:$0xff]
    %v67 = vld [vmem:[#allocation5 + $0x28] sm:$0xff]
    %v68 = vld [vmem:[#allocation5 + $0x30] sm:$0xff]
    %v69 = vld [vmem:[#allocation5 + $0x38] sm:$0xff]
    %v70 = vld [vmem:[#allocation5 + $0x40] sm:$0xff]
    %v71 = vld [vmem:[#allocation5 + $0x48] sm:$0xff]
    %v72 = vld [vmem:[#allocation5 + $0x50] sm:$0xff]
    %v73 = vld [vmem:[#allocation5 + $0x58] sm:$0xff]
    %v74 = vld [vmem:[#allocation5 + $0x60] sm:$0xff]
    %v75 = vld [vmem:[#allocation5 + $0x68] sm:$0xff]
    %v76 = vld [vmem:[#allocation5 + $0x70] sm:$0xff]
    %v77 = vld [vmem:[#allocation5 + $0x78] sm:$0xff]
    %v78 = vld [vmem:[#allocation5 + $0x80] sm:$0xff]
    %v79 = vld [vmem:[#allocation5 + $0x88] sm:$0xff]
    %v80 = vld [vmem:[#allocation5 + $0x90] sm:$0xff]
    %v81 = vld [vmem:[#allocation5 + $0x98] sm:$0xff]
    %v82 = vld [vmem:[#allocation5 + $0xa0] sm:$0xff]
    %v83 = vld [vmem:[#allocation5 + $0xa8] sm:$0xff]
    %v84 = vld [vmem:[#allocation5 + $0xb0] sm:$0xff]
    %v85 = vld [vmem:[#allocation5 + $0xb8] sm:$0xff]
    %v86 = vld [vmem:[#allocation5 + $0xc0] sm:$0xff]
    %v87 = vld [vmem:[#allocation5 + $0xc8] sm:$0xff]
    %v88 = vld [vmem:[#allocation5 + $0xd0] sm:$0xff]
    %v89 = vld [vmem:[#allocation5 + $0xd8] sm:$0xff]
    %v90 = vld [vmem:[#allocation5 + $0xe0] sm:$0xff]
    %v91 = vld [vmem:[#allocation5 + $0xe8] sm:$0xff]
    %v92 = vld [vmem:[#allocation5 + $0xf0] sm:$0xff]
    %v93 = vld [vmem:[#allocation5 + $0xf8] sm:$0xff]
    %v94 = vld [vmem:[#allocation7] sm:$0xff]
    %v95 = vld [vmem:[#allocation7 + $0x8] sm:$0xff]
    %v96 = vld [vmem:[#allocation7 + $0x10] sm:$0xff]
    %v97 = vld [vmem:[#allocation7 + $0x18] sm:$0xff]
    %v98 = vld [vmem:[#allocation7 + $0x20] sm:$0xff]
    %v99 = vld [vmem:[#allocation7 + $0x28] sm:$0xff]
    %v100 = vld [vmem:[#allocation7 + $0x30] sm:$0xff]
    %v101 = vld [vmem:[#allocation7 + $0x38] sm:$0xff]
    %v102 = vld [vmem:[#allocation7 + $0x40] sm:$0xff]
    %v103 = vld [vmem:[#allocation7 + $0x48] sm:$0xff]
    %v104 = vld [vmem:[#allocation7 + $0x50] sm:$0xff]
    %v105 = vld [vmem:[#allocation7 + $0x58] sm:$0xff]
    %v106 = vld [vmem:[#allocation7 + $0x60] sm:$0xff]
    %v107 = vld [vmem:[#allocation7 + $0x68] sm:$0xff]
    %v108 = vld [vmem:[#allocation7 + $0x70] sm:$0xff]
    %v109 = vld [vmem:[#allocation7 + $0x78] sm:$0xff]
    %v110 = vld [vmem:[%s2] sm:$0x1]
    %v111 = vld [vmem:[%s4] sm:$0x1]
    %v112 = vld [vmem:[#allocation2] sm:$0xff]
    %v113 = vld [vmem:[#allocation2 + $0x8] sm:$0xff]
    %114 = vmatprep.subr.mxu0 %v63
    %115 = vmatpush1.msra.mxu0 %v62
    %116 = vmatprep.subr.mxu0 %v65
    %117 = vmatpush1.msra.mxu0 %v64
    %118 = vmatprep.subr.mxu0 %v67
    %119 = vmatpush1.msra.mxu0 %v66
    %120 = vmatprep.subr.mxu0 %v69
    %121 = vmatpush1.msra.mxu0 %v68
    %122 = vmatprep.subr.mxu0 %v71
    %123 = vmatpush1.msra.mxu0 %v70
    %124 = vmatprep.subr.mxu0 %v73
    %125 = vmatpush1.msra.mxu0 %v72
    %126 = vmatprep.subr.mxu0 %v75
    %127 = vmatpush1.msra.mxu0 %v74
    %128 = vmatprep.subr.mxu0 %v77
    %129 = vmatpush1.msra.mxu0 %v76
    %130 = vmatprep.subr.mxu0 %v79
    %131 = vmatpush1.msra.mxu0 %v78
    %132 = vmatprep.subr.mxu0 %v81
    %133 = vmatpush1.msra.mxu0 %v80
    %134 = vmatprep.subr.mxu0 %v83
    %135 = vmatpush1.msra.mxu0 %v82
    %136 = vmatprep.subr.mxu0 %v85
    %137 = vmatpush1.msra.mxu0 %v84
    %138 = vmatprep.subr.mxu0 %v87
    %139 = vmatpush1.msra.mxu0 %v86
    %140 = vmatprep.subr.mxu0 %v89
    %141 = vmatpush1.msra.mxu0 %v88
    %142 = vmatprep.subr.mxu0 %v91
    %143 = vmatpush1.msra.mxu0 %v90
    %144 = vmatprep.subr.mxu0 %v93
    %145 = vmatpush1.msra.mxu0 %v92
    %146 = vmatprep.subr.mxu0 0.0
    %147 = vmatpush1.msra.mxu0 0.0
    %148 = vmatprep.subr.mxu0 0.0
    %149 = vmatpush1.msra.mxu0 0.0
    %150 = vmatprep.subr.mxu0 0.0
    %151 = vmatpush1.msra.mxu0 0.0
    %152 = vmatprep.subr.mxu0 0.0
    %153 = vmatpush1.msra.mxu0 0.0
    %154 = vmatprep.subr.mxu0 0.0
    %155 = vmatpush1.msra.mxu0 0.0
    %156 = vmatprep.subr.mxu0 0.0
    %157 = vmatpush1.msra.mxu0 0.0
    %158 = vmatprep.subr.mxu0 0.0
    %159 = vmatpush1.msra.mxu0 0.0
    %160 = vmatprep.subr.mxu0 0.0
    %161 = vmatpush1.msra.mxu0 0.0
    %162 = vmatprep.subr.mxu0 0.0
    %163 = vmatpush1.msra.mxu0 0.0
    %164 = vmatprep.subr.mxu0 0.0
    %165 = vmatpush1.msra.mxu0 0.0
    %166 = vmatprep.subr.mxu0 0.0
    %167 = vmatpush1.msra.mxu0 0.0
    %168 = vmatprep.subr.mxu0 0.0
    %169 = vmatpush1.msra.mxu0 0.0
    %170 = vmatprep.subr.mxu0 0.0
    %171 = vmatpush1.msra.mxu0 0.0
    %172 = vmatprep.subr.mxu0 0.0
    %173 = vmatpush1.msra.mxu0 0.0
    %174 = vmatprep.subr.mxu0 0.0
    %175 = vmatpush1.msra.mxu0 0.0
    %176 = vmatprep.subr.mxu0 0.0
    %177 = vmatpush1.msra.mxu0 0.0
    %178 = vmatprep.mubr.f32.mxu0 0.0
    %179 = vmatmul.mubr.f32.gmra.mrb[0].mxu0 %v112
    %v180 = vpop.f32.mrb[0].mxu0
    %v181 = vadd.f32 0.0, %v180
    %v182 = vpop.f32.mrb[0].mxu0
    %v183 = vadd.f32 0.0, %v182
    %184 = vmatprep.mubr.f32.mxu0 0.0
    %185 = vmatmul.mubr.f32.gmra.mrb[0].mxu0 %v113
    %v186 = vpop.f32.mrb[0].mxu0
    %v187 = vadd.f32 0.0, %v186
    %v188 = vpop.f32.mrb[0].mxu0
    %v189 = vadd.f32 0.0, %v188
    %190 = vdwg.mxu0
    %v192 = vlaneseq
    %v193 = vshrl.u32 %v192, 7
    %v194 = vsub.s32 0, %v193
    %v195 = vrot.slane %v110, %v194
    %v197 = vadd.f32 %v181, %v195
    %v198 = vadd.f32 %v187, %v195
    %v199 = vmax.f32 %v197, 0.0
    %v200 = vmax.f32 %v198, 0.0
    %201 = vmatprep.subr.mxu0 0.0
    %202 = vmatpush1.msra.mxu0 %v94
    %203 = vmatprep.subr.mxu0 0.0
    %204 = vmatpush1.msra.mxu0 %v95
    %205 = vmatprep.subr.mxu0 0.0
    %206 = vmatpush1.msra.mxu0 %v96
    %207 = vmatprep.subr.mxu0 0.0
    %208 = vmatpush1.msra.mxu0 %v97
    %209 = vmatprep.subr.mxu0 0.0
    %210 = vmatpush1.msra.mxu0 %v98
    %211 = vmatprep.subr.mxu0 0.0
    %212 = vmatpush1.msra.mxu0 %v99
    %213 = vmatprep.subr.mxu0 0.0
    %214 = vmatpush1.msra.mxu0 %v100
    %215 = vmatprep.subr.mxu0 0.0
    %216 = vmatpush1.msra.mxu0 %v101
    %217 = vmatprep.subr.mxu0 0.0
    %218 = vmatpush1.msra.mxu0 %v102
    %219 = vmatprep.subr.mxu0 0.0
    %220 = vmatpush1.msra.mxu0 %v103
    %221 = vmatprep.subr.mxu0 0.0
    %222 = vmatpush1.msra.mxu0 %v104
    %223 = vmatprep.subr.mxu0 0.0
    %224 = vmatpush1.msra.mxu0 %v105
    %225 = vmatprep.subr.mxu0 0.0
    %226 = vmatpush1.msra.mxu0 %v106
    %227 = vmatprep.subr.mxu0 0.0
    %228 = vmatpush1.msra.mxu0 %v107
    %229 = vmatprep.subr.mxu0 0.0
    %230 = vmatpush1.msra.mxu0 %v108
    %231 = vmatprep.subr.mxu0 0.0
    %232 = vmatpush1.msra.mxu0 %v109
    %233 = vmatprep.subr.mxu0 0.0
    %234 = vmatpush1.msra.mxu0 0.0
    %235 = vmatprep.subr.mxu0 0.0
    %236 = vmatpush1.msra.mxu0 0.0
    %237 = vmatprep.subr.mxu0 0.0
    %238 = vmatpush1.msra.mxu0 0.0
    %239 = vmatprep.subr.mxu0 0.0
    %240 = vmatpush1.msra.mxu0 0.0
    %241 = vmatprep.subr.mxu0 0.0
    %242 = vmatpush1.msra.mxu0 0.0
    %243 = vmatprep.subr.mxu0 0.0
    %244 = vmatpush1.msra.mxu0 0.0
    %245 = vmatprep.subr.mxu0 0.0
    %246 = vmatpush1.msra.mxu0 0.0
    %247 = vmatprep.subr.mxu0 0.0
    %248 = vmatpush1.msra.mxu0 0.0
    %249 = vmatprep.subr.mxu0 0.0
    %250 = vmatpush1.msra.mxu0 0.0
    %251 = vmatprep.subr.mxu0 0.0
    %252 = vmatpush1.msra.mxu0 0.0
    %253 = vmatprep.subr.mxu0 0.0
    %254 = vmatpush1.msra.mxu0 0.0
    %255 = vmatprep.subr.mxu0 0.0
    %256 = vmatpush1.msra.mxu0 0.0
    %257 = vmatprep.subr.mxu0 0.0
    %258 = vmatpush1.msra.mxu0 0.0
    %259 = vmatprep.subr.mxu0 0.0
    %260 = vmatpush1.msra.mxu0 0.0
    %261 = vmatprep.subr.mxu0 0.0
    %262 = vmatpush1.msra.mxu0 0.0
    %263 = vmatprep.subr.mxu0 0.0
    %264 = vmatpush1.msra.mxu0 0.0
    %265 = vmatprep.mubr.f32.mxu0 0.0
    %266 = vmatmul.mubr.f32.gmra.mrb[0].mxu0 %v199
    %v267 = vpop.f32.mrb[0].mxu0
    %v268 = vadd.f32 %v183, %v267
    %v269 = vpop.f32.mrb[0].mxu0
    %270 = vmatprep.mubr.f32.mxu0 0.0
    %271 = vmatmul.mubr.f32.gmra.mrb[0].mxu0 %v200
    %v272 = vpop.f32.mrb[0].mxu0
    %v273 = vadd.f32 %v189, %v272
    %v274 = vpop.f32.mrb[0].mxu0
    %275 = vdwg.mxu0
    %v277 = vlaneseq
    %v278 = vshrl.u32 %v277, 7
    %v279 = vsub.s32 0, %v278
    %v280 = vrot.slane %v111, %v279
    %v282 = vadd.f32 %v268, %v280
    %v283 = vadd.f32 %v273, %v280
    %284 = vst [vmem:[#allocation8] sm:$0xff] %v282
    %285 = vst [vmem:[#allocation8 + $0x8] sm:$0xff] %v283
    // Predicated region
    $region34: #{tpu_custom_call.1} parent=1 // pred_check
      _
    $region35: #{tpu_custom_call.1} parent=1 // pred_check_branch
      %287 = sbr.rel (0) target = $region37
    $region36: #{tpu_custom_call.1} parent=1 // pred_region
      %s289 = ssub.s32 256, 256
      %290 = vsyncadd [#allocation4], %s289
      %s291 = sshll.u32 [#allocation8], 4
      %s292 = int_to_ptr.vmem [resolvable:$true] %s291
      %297 = dma.vmem_to_hbm [thread:$0]  %s292, 256, %s5, [#allocation4], 128, 128, 8
    $region37: #{tpu_custom_call.1} parent=1 // pred_fallthru
      _
    // Predicated region
    $region38: #{tpu_custom_call.1} parent=1 // pred_check
      _
    $region39: #{tpu_custom_call.1} parent=1 // pred_check_branch
      %299 = sbr.rel (0) target = $region41
    $region40: #{tpu_custom_call.1} parent=1 // pred_region
      %300 = dma.done [#allocation4], 256
    $region41: #{tpu_custom_call.1} parent=1 // pred_fallthru
      _
    %301 = vsyncpa [#allocation3], 1
    %302 = vsyncpa [#allocation6], 1
    %303 = vsyncpa [#allocation4], 1

// kernel: tpu_custom_call.1
$region0: #{tpu_custom_call.1}
  #allocation0 [shape = 'u32[]', space=smem, size = 0x4, offset = 0x4, fixed_abs, tag = 'smem constant byte address 0x4 - core index']
  #allocation1 [shape = 'u32[144,128]{1,0:T(1,128)}', space=vmem, size = 0x12000, scoped, tag = 'internal scratch']
  %s0 = inlined_call_operand.hbm [shape: f32[16,128], index: 0, kind: input, shape index: {}]
  %s1 = inlined_call_operand.hbm [shape: f32[128,256], index: 1, kind: input, shape index: {}]
  %s2 = inlined_call_operand.vmem [shape: f32[1,128], index: 2, kind: input, shape index: {}]
  %s3 = inlined_call_operand.hbm [shape: f32[128,128], index: 3, kind: input, shape index: {}]
  %s4 = inlined_call_operand.vmem [shape: f32[1,128], index: 4, kind: input, shape index: {}]
  %s5 = inlined_call_operand.hbm [shape: f32[16,128], index: 5, kind: output, shape index: {}]
  %s6 = sld [smem:[#allocation0]]
  $region42: #{tpu_custom_call.1} parent=0
    _
  %s8 = ssub.s32 1, %s6
  %s9 = scalar_select 0, %s8, %s6
  $region1: #{tpu_custom_call.1} parent=0
    #allocation2 [shape = 'u8[8192]{0}', space=vmem, size = 0x2000, scoped, tag = 'input window, operand 0, single buffered']
    #allocation3 [shape = 's32[1]{0}', space=sflag, size = 0x4, scoped, tag = 'scoped memory for tpu_custom_call.1']
    #allocation4 [shape = 's32[1]{0}', space=sflag, size = 0x4, scoped, tag = 'scoped memory for tpu_custom_call.1']
    #allocation5 [shape = 'u8[131072]{0}', space=vmem, size = 0x20000, scoped, tag = 'input window, operand 1, single buffered']
    #allocation6 [shape = 's32[1]{0}', space=sflag, size = 0x4, scoped, tag = 'scoped memory for tpu_custom_call.1']
    #allocation7 [shape = 'u8[65536]{0}', space=vmem, size = 0x10000, scoped, tag = 'input window, operand 3, single buffered']
    #allocation8 [shape = 'u8[8192]{0}', space=vmem, size = 0x2000, scoped, tag = 'output window, operand 0, single buffered']
    %10 = vsyncpa [#allocation3], 0
    %11 = vsyncpa [#allocation6], 0
    %12 = vsyncpa [#allocation4], 0
    // Predicated region
    $region2: #{tpu_custom_call.1} parent=1 // pred_check
      _
    $region3: #{tpu_custom_call.1} parent=1 // pred_check_branch
      %14 = sbr.rel (0) target = $region5
    $region4: #{tpu_custom_call.1} parent=1 // pred_region
      %s16 = ssub.s32 256, 256
      %17 = vsyncadd [#allocation3], %s16
      %s18 = sshll.u32 [#allocation2], 4
      %s19 = int_to_ptr.vmem [resolvable:$true] %s18
      %24 = dma.hbm_to_vmem [thread:$0]  %s0, 256, %s19, [#allocation3], 128, 128, 8
    $region5: #{tpu_custom_call.1} parent=1 // pred_fallthru
      _
    // Predicated region
    $region6: #{tpu_custom_call.1} parent=1 // pred_check
      _
    $region7: #{tpu_custom_call.1} parent=1 // pred_check_branch
      %26 = sbr.rel (0) target = $region9
    $region8: #{tpu_custom_call.1} parent=1 // pred_region
      %s28 = ssub.s32 4096, 4096
      %29 = vsyncadd [#allocation6], %s28
      %s30 = sshll.u32 [#allocation5], 4
      %s31 = int_to_ptr.vmem [resolvable:$true] %s30
      %36 = dma.hbm_to_vmem [thread:$0]  %s1, 4096, %s31, [#allocation6], 256, 256, 16
    $region9: #{tpu_custom_call.1} parent=1 // pred_fallthru
      _
    // Predicated region
    $region10: #{tpu_custom_call.1} parent=1 // pred_check
      _
    $region11: #{tpu_custom_call.1} parent=1 // pred_check_branch
      %38 = sbr.rel (0) target = $region13
    $region12: #{tpu_custom_call.1} parent=1 // pred_region
      _
    $region13: #{tpu_custom_call.1} parent=1 // pred_fallthru
      _
    // Predicated region
    $region14: #{tpu_custom_call.1} parent=1 // pred_check
      _
    $region15: #{tpu_custom_call.1} parent=1 // pred_check_branch
      %40 = sbr.rel (0) target = $region17
    $region16: #{tpu_custom_call.1} parent=1 // pred_region
      %s42 = ssub.s32 2048, 2048
      %43 = vsyncadd [#allocation6], %s42
      %s44 = sshll.u32 [#allocation7], 4
      %s45 = int_to_ptr.vmem [resolvable:$true] %s44
      %50 = dma.hbm_to_vmem [thread:$0]  %s3, 2048, %s45, [#allocation6], 128, 128, 8
    $region17: #{tpu_custom_call.1} parent=1 // pred_fallthru
      _
    // Predicated region
    $region18: #{tpu_custom_call.1} parent=1 // pred_check
      _
    $region19: #{tpu_custom_call.1} parent=1 // pred_check_branch
      %52 = sbr.rel (0) target = $region21
    $region20: #{tpu_custom_call.1} parent=1 // pred_region
      _
    $region21: #{tpu_custom_call.1} parent=1 // pred_fallthru
      _
    // Predicated region
    $region22: #{tpu_custom_call.1} parent=1 // pred_check
      _
    $region23: #{tpu_custom_call.1} parent=1 // pred_check_branch
      %54 = sbr.rel (0) target = $region25
    $region24: #{tpu_custom_call.1} parent=1 // pred_region
      %55 = dma.done [#allocation3], 256
    $region25: #{tpu_custom_call.1} parent=1 // pred_fallthru
      _
    // Predicated region
    $region26: #{tpu_custom_call.1} parent=1 // pred_check
      _
    $region27: #{tpu_custom_call.1} parent=1 // pred_check_branch
      %57 = sbr.rel (0) target = $region29
    $region28: #{tpu_custom_call.1} parent=1 // pred_region
      %58 = dma.done [#allocation6], 4096
    $region29: #{tpu_custom_call.1} parent=1 // pred_fallthru
      _
    // Predicated region
    $region30: #{tpu_custom_call.1} parent=1 // pred_check
      _
    $region31: #{tpu_custom_call.1} parent=1 // pred_check_branch
      %60 = sbr.rel (0) target = $region33
    $region32: #{tpu_custom_call.1} parent=1 // pred_region
      %61 = dma.done [#allocation6], 2048
    $region33: #{tpu_custom_call.1} parent=1 // pred_fallthru
      _
    %v62 = vld [vmem:[#allocation5] sm:$0xff]
    %v63 = vld [vmem:[#allocation5 + $0x8] sm:$0xff]
    %v64 = vld [vmem:[#allocation5 + $0x10] sm:$0xff]
    %v65 = vld [vmem:[#allocation5 + $0x18] sm:$0xff]
    %v66 = vld [vmem:[#allocation5 + $0x20] sm:$0xff]
    %v67 = vld [vmem:[#allocation5 + $0x28] sm:$0xff]
    %v68 = vld [vmem:[#allocation5 + $0x30] sm:$0xff]
    %v69 = vld [vmem:[#allocation5 + $0x38] sm:$0xff]
    %v70 = vld [vmem:[#allocation5 + $0x40] sm:$0xff]
    %v71 = vld [vmem:[#allocation5 + $0x48] sm:$0xff]
    %v72 = vld [vmem:[#allocation5 + $0x50] sm:$0xff]
    %v73 = vld [vmem:[#allocation5 + $0x58] sm:$0xff]
    %v74 = vld [vmem:[#allocation5 + $0x60] sm:$0xff]
    %v75 = vld [vmem:[#allocation5 + $0x68] sm:$0xff]
    %v76 = vld [vmem:[#allocation5 + $0x70] sm:$0xff]
    %v77 = vld [vmem:[#allocation5 + $0x78] sm:$0xff]
    %v78 = vld [vmem:[#allocation5 + $0x80] sm:$0xff]
    %v79 = vld [vmem:[#allocation5 + $0x88] sm:$0xff]
    %v80 = vld [vmem:[#allocation5 + $0x90] sm:$0xff]
    %v81 = vld [vmem:[#allocation5 + $0x98] sm:$0xff]
    %v82 = vld [vmem:[#allocation5 + $0xa0] sm:$0xff]
    %v83 = vld [vmem:[#allocation5 + $0xa8] sm:$0xff]
    %v84 = vld [vmem:[#allocation5 + $0xb0] sm:$0xff]
    %v85 = vld [vmem:[#allocation5 + $0xb8] sm:$0xff]
    %v86 = vld [vmem:[#allocation5 + $0xc0] sm:$0xff]
    %v87 = vld [vmem:[#allocation5 + $0xc8] sm:$0xff]
    %v88 = vld [vmem:[#allocation5 + $0xd0] sm:$0xff]
    %v89 = vld [vmem:[#allocation5 + $0xd8] sm:$0xff]
    %v90 = vld [vmem:[#allocation5 + $0xe0] sm:$0xff]
    %v91 = vld [vmem:[#allocation5 + $0xe8] sm:$0xff]
    %v92 = vld [vmem:[#allocation5 + $0xf0] sm:$0xff]
    %v93 = vld [vmem:[#allocation5 + $0xf8] sm:$0xff]
    %v94 = vld [vmem:[#allocation7] sm:$0xff]
    %v95 = vld [vmem:[#allocation7 + $0x8] sm:$0xff]
    %v96 = vld [vmem:[#allocation7 + $0x10] sm:$0xff]
    %v97 = vld [vmem:[#allocation7 + $0x18] sm:$0xff]
    %v98 = vld [vmem:[#allocation7 + $0x20] sm:$0xff]
    %v99 = vld [vmem:[#allocation7 + $0x28] sm:$0xff]
    %v100 = vld [vmem:[#allocation7 + $0x30] sm:$0xff]
    %v101 = vld [vmem:[#allocation7 + $0x38] sm:$0xff]
    %v102 = vld [vmem:[#allocation7 + $0x40] sm:$0xff]
    %v103 = vld [vmem:[#allocation7 + $0x48] sm:$0xff]
    %v104 = vld [vmem:[#allocation7 + $0x50] sm:$0xff]
    %v105 = vld [vmem:[#allocation7 + $0x58] sm:$0xff]
    %v106 = vld [vmem:[#allocation7 + $0x60] sm:$0xff]
    %v107 = vld [vmem:[#allocation7 + $0x68] sm:$0xff]
    %v108 = vld [vmem:[#allocation7 + $0x70] sm:$0xff]
    %v109 = vld [vmem:[#allocation7 + $0x78] sm:$0xff]
    %v110 = vld [vmem:[%s2] sm:$0x1]
    %v111 = vld [vmem:[%s4] sm:$0x1]
    %v112 = vld [vmem:[#allocation2] sm:$0xff]
    %v113 = vld [vmem:[#allocation2 + $0x8] sm:$0xff]
    %114 = vmatprep.subr.mxu0 %v63
    %115 = vmatpush1.msra.mxu0 %v62
    %116 = vmatprep.subr.mxu0 %v65
    %117 = vmatpush1.msra.mxu0 %v64
    %118 = vmatprep.subr.mxu0 %v67
    %119 = vmatpush1.msra.mxu0 %v66
    %120 = vmatprep.subr.mxu0 %v69
    %121 = vmatpush1.msra.mxu0 %v68
    %122 = vmatprep.subr.mxu0 %v71
    %123 = vmatpush1.msra.mxu0 %v70
    %124 = vmatprep.subr.mxu0 %v73
    %125 = vmatpush1.msra.mxu0 %v72
    %126 = vmatprep.subr.mxu0 %v75
    %127 = vmatpush1.msra.mxu0 %v74
    %128 = vmatprep.subr.mxu0 %v77
    %129 = vmatpush1.msra.mxu0 %v76
    %130 = vmatprep.subr.mxu0 %v79
    %131 = vmatpush1.msra.mxu0 %v78
    %132 = vmatprep.subr.mxu0 %v81
    %133 = vmatpush1.msra.mxu0 %v80
    %134 = vmatprep.subr.mxu0 %v83
    %135 = vmatpush1.msra.mxu0 %v82
    %136 = vmatprep.subr.mxu0 %v85
    %137 = vmatpush1.msra.mxu0 %v84
    %138 = vmatprep.subr.mxu0 %v87
    %139 = vmatpush1.msra.mxu0 %v86
    %140 = vmatprep.subr.mxu0 %v89
    %141 = vmatpush1.msra.mxu0 %v88
    %142 = vmatprep.subr.mxu0 %v91
    %143 = vmatpush1.msra.mxu0 %v90
    %144 = vmatprep.subr.mxu0 %v93
    %145 = vmatpush1.msra.mxu0 %v92
    %146 = vmatprep.subr.mxu0 0.0
    %147 = vmatpush1.msra.mxu0 0.0
    %148 = vmatprep.subr.mxu0 0.0
    %149 = vmatpush1.msra.mxu0 0.0
    %150 = vmatprep.subr.mxu0 0.0
    %151 = vmatpush1.msra.mxu0 0.0
    %152 = vmatprep.subr.mxu0 0.0
    %153 = vmatpush1.msra.mxu0 0.0
    %154 = vmatprep.subr.mxu0 0.0
    %155 = vmatpush1.msra.mxu0 0.0
    %156 = vmatprep.subr.mxu0 0.0
    %157 = vmatpush1.msra.mxu0 0.0
    %158 = vmatprep.subr.mxu0 0.0
    %159 = vmatpush1.msra.mxu0 0.0
    %160 = vmatprep.subr.mxu0 0.0
    %161 = vmatpush1.msra.mxu0 0.0
    %162 = vmatprep.subr.mxu0 0.0
    %163 = vmatpush1.msra.mxu0 0.0
    %164 = vmatprep.subr.mxu0 0.0
    %165 = vmatpush1.msra.mxu0 0.0
    %166 = vmatprep.subr.mxu0 0.0
    %167 = vmatpush1.msra.mxu0 0.0
    %168 = vmatprep.subr.mxu0 0.0
    %169 = vmatpush1.msra.mxu0 0.0
    %170 = vmatprep.subr.mxu0 0.0
    %171 = vmatpush1.msra.mxu0 0.0
    %172 = vmatprep.subr.mxu0 0.0
    %173 = vmatpush1.msra.mxu0 0.0
    %174 = vmatprep.subr.mxu0 0.0
    %175 = vmatpush1.msra.mxu0 0.0
    %176 = vmatprep.subr.mxu0 0.0
    %177 = vmatpush1.msra.mxu0 0.0
    %178 = vmatprep.mubr.f32.mxu0 0.0
    %179 = vmatmul.mubr.f32.gmra.mrb[0].mxu0 %v112
    %v180 = vpop.f32.mrb[0].mxu0
    %v181 = vadd.f32 0.0, %v180
    %v182 = vpop.f32.mrb[0].mxu0
    %v183 = vadd.f32 0.0, %v182
    %184 = vmatprep.mubr.f32.mxu0 0.0
    %185 = vmatmul.mubr.f32.gmra.mrb[0].mxu0 %v113
    %v186 = vpop.f32.mrb[0].mxu0
    %v187 = vadd.f32 0.0, %v186
    %v188 = vpop.f32.mrb[0].mxu0
    %v189 = vadd.f32 0.0, %v188
    %190 = vdwg.mxu0
    %v192 = vlaneseq
    %v193 = vshrl.u32 %v192, 7
    %v194 = vsub.s32 0, %v193
    %v195 = vrot.slane %v110, %v194
    %v197 = vadd.f32 %v181, %v195
    %v198 = vadd.f32 %v187, %v195
    %v199 = vmax.f32 %v197, 0.0
    %v200 = vmax.f32 %v198, 0.0
    %201 = vmatprep.subr.mxu0 0.0
    %202 = vmatpush1.msra.mxu0 %v94
    %203 = vmatprep.subr.mxu0 0.0
    %204 = vmatpush1.msra.mxu0 %v95
    %205 = vmatprep.subr.mxu0 0.0
    %206 = vmatpush1.msra.mxu0 %v96
    %207 = vmatprep.subr.mxu0 0.0
    %208 = vmatpush1.msra.mxu0 %v97
    %209 = vmatprep.subr.mxu0 0.0
    %210 = vmatpush1.msra.mxu0 %v98
    %211 = vmatprep.subr.mxu0 0.0
    %212 = vmatpush1.msra.mxu0 %v99
    %213 = vmatprep.subr.mxu0 0.0
    %214 = vmatpush1.msra.mxu0 %v100
    %215 = vmatprep.subr.mxu0 0.0
    %216 = vmatpush1.msra.mxu0 %v101
    %217 = vmatprep.subr.mxu0 0.0
    %218 = vmatpush1.msra.mxu0 %v102
    %219 = vmatprep.subr.mxu0 0.0
    %220 = vmatpush1.msra.mxu0 %v103
    %221 = vmatprep.subr.mxu0 0.0
    %222 = vmatpush1.msra.mxu0 %v104
    %223 = vmatprep.subr.mxu0 0.0
    %224 = vmatpush1.msra.mxu0 %v105
    %225 = vmatprep.subr.mxu0 0.0
    %226 = vmatpush1.msra.mxu0 %v106
    %227 = vmatprep.subr.mxu0 0.0
    %228 = vmatpush1.msra.mxu0 %v107
    %229 = vmatprep.subr.mxu0 0.0
    %230 = vmatpush1.msra.mxu0 %v108
    %231 = vmatprep.subr.mxu0 0.0
    %232 = vmatpush1.msra.mxu0 %v109
    %233 = vmatprep.subr.mxu0 0.0
    %234 = vmatpush1.msra.mxu0 0.0
    %235 = vmatprep.subr.mxu0 0.0
    %236 = vmatpush1.msra.mxu0 0.0
    %237 = vmatprep.subr.mxu0 0.0
    %238 = vmatpush1.msra.mxu0 0.0
    %239 = vmatprep.subr.mxu0 0.0
    %240 = vmatpush1.msra.mxu0 0.0
    %241 = vmatprep.subr.mxu0 0.0
    %242 = vmatpush1.msra.mxu0 0.0
    %243 = vmatprep.subr.mxu0 0.0
    %244 = vmatpush1.msra.mxu0 0.0
    %245 = vmatprep.subr.mxu0 0.0
    %246 = vmatpush1.msra.mxu0 0.0
    %247 = vmatprep.subr.mxu0 0.0
    %248 = vmatpush1.msra.mxu0 0.0
    %249 = vmatprep.subr.mxu0 0.0
    %250 = vmatpush1.msra.mxu0 0.0
    %251 = vmatprep.subr.mxu0 0.0
    %252 = vmatpush1.msra.mxu0 0.0
    %253 = vmatprep.subr.mxu0 0.0
    %254 = vmatpush1.msra.mxu0 0.0
    %255 = vmatprep.subr.mxu0 0.0
    %256 = vmatpush1.msra.mxu0 0.0
    %257 = vmatprep.subr.mxu0 0.0
    %258 = vmatpush1.msra.mxu0 0.0
    %259 = vmatprep.subr.mxu0 0.0
    %260 = vmatpush1.msra.mxu0 0.0
    %261 = vmatprep.subr.mxu0 0.0
    %262 = vmatpush1.msra.mxu0 0.0
    %263 = vmatprep.subr.mxu0 0.0
    %264 = vmatpush1.msra.mxu0 0.0
    %265 = vmatprep.mubr.f32.mxu0 0.0
    %266 = vmatmul.mubr.f32.gmra.mrb[0].mxu0 %v199
    %v267 = vpop.f32.mrb[0].mxu0
    %v268 = vadd.f32 %v183, %v267
    %v269 = vpop.f32.mrb[0].mxu0
    %270 = vmatprep.mubr.f32.mxu0 0.0
    %271 = vmatmul.mubr.f32.gmra.mrb[0].mxu0 %v200
    %v272 = vpop.f32.mrb[0].mxu0
    %v273 = vadd.f32 %v189, %v272
    %v274 = vpop.f32.mrb[0].mxu0
    %275 = vdwg.mxu0
    %v277 = vlaneseq
    %v278 = vshrl.u32 %v277, 7
    %v279 = vsub.s32 0, %v278
    %v280 = vrot.slane %v111, %v279
    %v282 = vadd.f32 %v268, %v280
    %v283 = vadd.f32 %v273, %v280
    %284 = vst [vmem:[#allocation8] sm:$0xff] %v282
    %285 = vst [vmem:[#allocation8 + $0x8] sm:$0xff] %v283
    // Predicated region
    $region34: #{tpu_custom_call.1} parent=1 // pred_check
      _
    $region35: #{tpu_custom_call.1} parent=1 // pred_check_branch
      %287 = sbr.rel (0) target = $region37
    $region36: #{tpu_custom_call.1} parent=1 // pred_region
      %s289 = ssub.s32 256, 256
      %290 = vsyncadd [#allocation4], %s289
      %s291 = sshll.u32 [#allocation8], 4
      %s292 = int_to_ptr.vmem [resolvable:$true] %s291
      %297 = dma.vmem_to_hbm [thread:$0]  %s292, 256, %s5, [#allocation4], 128, 128, 8
    $region37: #{tpu_custom_call.1} parent=1 // pred_fallthru
      _
    // Predicated region
    $region38: #{tpu_custom_call.1} parent=1 // pred_check
      _
    $region39: #{tpu_custom_call.1} parent=1 // pred_check_branch
      %299 = sbr.rel (0) target = $region41
    $region40: #{tpu_custom_call.1} parent=1 // pred_region
      %300 = dma.done [#allocation4], 256
    $region41: #{tpu_custom_call.1} parent=1 // pred_fallthru
      _
    %301 = vsyncpa [#allocation3], 1
    %302 = vsyncpa [#allocation6], 1
    %303 = vsyncpa [#allocation4], 1

</llo_original>
